<compile_context>
chip_gen: v7x
topology: tpu7x:2x2x1
jax: 0.10.0
libtpu: 0.0.40
codegen_flags: <defaults>
</compile_context>

<pallas_src>
import functools

import jax
import jax.numpy as jnp
import numpy as np
from jax.experimental import pallas as pl
from jax.experimental.pallas import tpu as pltpu

LANE = 128


def _round_up(x, m):
    return ((x + m - 1) // m) * m


def _largest_divisor_tile(n_pad, target):
    """Largest multiple of 128 that divides n_pad and is <= target."""
    t = max(LANE, (min(target, n_pad) // LANE) * LANE)
    while n_pad % t:
        t -= LANE
    return t


def _choose_tiles(num_nodes):
    """Pick (n_pad, tm, tk): pad N up to the k tile instead of shrinking tiles."""
    n128 = _round_up(max(num_nodes, LANE), LANE)
    # k tile: large (amortizes ~0.35us per-grid-step overhead), power-of-two*128,
    # capped so padding waste stays <= ~25% of the real row count.
    tk = LANE
    while tk * 2 <= min(n128, 1024):
        tk *= 2
    while tk > LANE and (_round_up(n128, tk) - n128) > n128 // 4:
        tk //= 2
    n_pad = _round_up(n128, tk)
    # row tile: largest multiple of 128 dividing n_pad, <= 512.
    tm = _largest_divisor_tile(n_pad, 512)
    # v7x megacore: prefer >= 2 row tiles so both TensorCores get work.
    if n_pad >= 2 * LANE and n_pad // tm < 2:
        tm = _largest_divisor_tile(n_pad, max(LANE, n_pad // 2))
    return n_pad, tm, tk


def _vmem_limit_bytes():
    """Per-generation scoped-VMEM budget: ~3/4 of physical VMEM."""
    cap = 64 * 1024 * 1024  # conservative fallback (v7x-sized)
    try:
        info = pltpu.get_tpu_info()
        cap = int(getattr(info, "vmem_capacity_bytes", cap))
    except Exception:
        pass
    return (cap * 3) // 4  # ~96 MiB on v5e/v6e, ~48 MiB on v7x


def _pad_2d(x, rows, cols):
    return jnp.pad(x, ((0, rows - x.shape[0]), (0, cols - x.shape[1])))


# ----------------------------------------------------------------------------
# Kernel 1: per-node feature transform.
#   One matmul against [W_neigh | W_self]  ->  H (bf16) and S = X@W_self + b (f32)
# ----------------------------------------------------------------------------
def transform_kernel(x_ref, w_ref, b_ref, h_ref, s_ref, *, f_out):
    hs = jnp.dot(x_ref[...], w_ref[...], preferred_element_type=jnp.float32)
    h_ref[...] = hs[:, :f_out].astype(h_ref.dtype)
    s_ref[...] = (hs[:, f_out:] + b_ref[...]).astype(s_ref.dtype)


def feature_transform(x, w_cat, bias2d, *, f_out, tm, vmem_limit):
    n_pad, f_in = x.shape
    kernel = functools.partial(transform_kernel, f_out=f_out)
    flops = 2 * n_pad * f_in * (2 * f_out)
    bytes_accessed = (n_pad * f_in * 2 + f_in * (2 * f_out) * 2
                      + f_out * 4 + n_pad * f_out * (2 + 4))
    return pl.pallas_call(
        kernel,
        out_shape=(
            jax.ShapeDtypeStruct((n_pad, f_out), jnp.bfloat16),  # H
            jax.ShapeDtypeStruct((n_pad, f_out), jnp.float32),   # S
        ),
        grid=(n_pad // tm,),
        in_specs=[
            pl.BlockSpec((tm, f_in), lambda i: (i, 0)),          # X row tile
            pl.BlockSpec((f_in, 2 * f_out), lambda i: (0, 0)),   # [W_neigh | W_self]
            pl.BlockSpec((1, f_out), lambda i: (0, 0)),          # bias
        ],
        out_specs=(
            pl.BlockSpec((tm, f_out), lambda i: (i, 0)),
            pl.BlockSpec((tm, f_out), lambda i: (i, 0)),
        ),
        compiler_params=pltpu.CompilerParams(
            dimension_semantics=("parallel",),
            vmem_limit_bytes=vmem_limit,
        ),
        cost_estimate=pl.CostEstimate(
            flops=flops, transcendentals=0, bytes_accessed=bytes_accessed),
    )(x, w_cat, bias2d)


# ----------------------------------------------------------------------------
# Kernel 2: tiled aggregation  out = inv_deg * (A_raw @ H) + S  (+ optional ReLU)
#   grid = (row tiles, k tiles); f32 accumulator in VMEM scratch.
#   H is either fully VMEM-resident (index_map constant) or streamed per k block.
# ----------------------------------------------------------------------------
def aggregate_kernel(a_ref, h_ref, s_ref, inv_deg_ref, o_ref, acc_ref,
                     *, apply_relu, h_resident, tk):
    k = pl.program_id(1)

    @pl.when(k == 0)
    def _():
        acc_ref[...] = jnp.zeros_like(acc_ref)

    if h_resident:
        start = pl.multiple_of(k * tk, LANE)
        h_blk = h_ref[pl.ds(start, tk), :]
    else:
        h_blk = h_ref[...]

    acc_ref[...] += jnp.dot(a_ref[...], h_blk,
                            preferred_element_type=jnp.float32)

    @pl.when(k == pl.num_programs(1) - 1)
    def _():
        # mean normalization (per-row f32 scale) + self term + bias
        out = acc_ref[...] * inv_deg_ref[...] + s_ref[...]
        if apply_relu:
            out = jnp.maximum(out, 0.0)
        o_ref[...] = out.astype(o_ref.dtype)


def aggregate(a_bf16, h, s, inv_deg, *, apply_relu, out_dtype, tm, tk, vmem_limit):
    n_pad = a_bf16.shape[0]
    f_out = h.shape[1]
    out_bytes = jnp.dtype(out_dtype).itemsize

    # Decide whether H fits VMEM-resident (budget assumes double-buffering).
    resident_h_bytes = n_pad * f_out * 2
    base_bytes = (2 * tm * tk * 2            # A tiles (bf16, double-buffered)
                  + 2 * tm * f_out * 4       # S tiles (f32)
                  + 2 * tm * LANE * 4        # inv_deg tiles (lane-padded)
                  + 2 * tm * f_out * out_bytes
                  + tm * f_out * 4)          # accumulator scratch
    h_resident = base_bytes + 2 * resident_h_bytes <= vmem_limit

    if h_resident:
        h_spec = pl.BlockSpec((n_pad, f_out), lambda i, k: (0, 0))
        h_hbm_bytes = resident_h_bytes                      # read once
    else:
        h_spec = pl.BlockSpec((tk, f_out), lambda i, k: (k, 0))
        h_hbm_bytes = (n_pad // tm) * n_pad * f_out * 2     # re-read per row tile

    kernel = functools.partial(aggregate_kernel, apply_relu=apply_relu,
                               h_resident=h_resident, tk=tk)
    flops = 2 * n_pad * n_pad * f_out
    bytes_accessed = (n_pad * n_pad * 2 + h_hbm_bytes
                      + n_pad * f_out * (4 + out_bytes) + n_pad * 4)

    return pl.pallas_call(
        kernel,
        out_shape=jax.ShapeDtypeStruct((n_pad, f_out), out_dtype),
        grid=(n_pad // tm, n_pad // tk),
        in_specs=[
            pl.BlockSpec((tm, tk), lambda i, k: (i, k)),     # A tile (bf16, raw weights)
            h_spec,                                          # H (resident or streamed)
            pl.BlockSpec((tm, f_out), lambda i, k: (i, 0)),  # S tile (f32)
            pl.BlockSpec((tm, 1), lambda i, k: (i, 0)),      # inv_deg column (f32)
        ],
        out_specs=pl.BlockSpec((tm, f_out), lambda i, k: (i, 0)),
        scratch_shapes=[pltpu.VMEM((tm, f_out), jnp.float32)],
        compiler_params=pltpu.CompilerParams(
            dimension_semantics=("parallel", "arbitrary"),
            vmem_limit_bytes=vmem_limit,
        ),
        cost_estimate=pl.CostEstimate(
            flops=flops, transcendentals=0, bytes_accessed=bytes_accessed),
    )(a_bf16, h, s, inv_deg)


# ----------------------------------------------------------------------------
# Glue: dense adjacency, built directly in bf16 (raw edge-weight sums);
#       mean normalization (1/in_degree) is applied inside the aggregate kernel.
#   A[dst, src] = sum of w(src->dst)   ;   inv_deg[dst] = 1 / max(in_degree, 1)
# ----------------------------------------------------------------------------
def build_adjacency(edge_index, edge_weight, n_pad):
    src = edge_index[0]
    dst = edge_index[1]
    a = jnp.zeros((n_pad, n_pad), jnp.bfloat16)
    a = a.at[dst, src].add(edge_weight.astype(jnp.bfloat16))
    deg = jnp.zeros((n_pad,), jnp.float32).at[dst].add(1.0)
    inv_deg = 1.0 / jnp.maximum(deg, 1.0)
    return a, inv_deg.reshape(n_pad, 1)


# ----------------------------------------------------------------------------
# Full GNN forward
# ----------------------------------------------------------------------------
def gnn_forward(params, x, edge_index, edge_weight):
    num_nodes, input_dim = x.shape
    output_dim = params[-1][0].shape[1]
    num_layers = len(params)

    n_pad, tm, tk = _choose_tiles(num_nodes)
    vmem_limit = _vmem_limit_bytes()

    # Adjacency built once in bf16 (no f32 N^2 materialization), reused by all layers.
    a_bf16, inv_deg = build_adjacency(edge_index, edge_weight, n_pad)

    # Lane-dense input: pad node and feature dims to multiples of 128.
    f_in_p = _round_up(input_dim, LANE)
    h = _pad_2d(x.astype(jnp.float32), n_pad, f_in_p).astype(jnp.bfloat16)

    out = None
    for i, (w_neigh, w_self, bias) in enumerate(params):
        f_in, f_out = w_neigh.shape
        f_in_p = _round_up(f_in, LANE)
        f_out_p = _round_up(f_out, LANE)
        wn = _pad_2d(w_neigh.astype(jnp.float32), f_in_p, f_out_p)
        ws = _pad_2d(w_self.astype(jnp.float32), f_in_p, f_out_p)
        w_cat = jnp.concatenate([wn, ws], axis=1).astype(jnp.bfloat16)
        b2 = _pad_2d(bias.reshape(1, f_out).astype(jnp.float32), 1, f_out_p)

        h_neigh, s_self = feature_transform(
            h, w_cat, b2, f_out=f_out_p, tm=tm, vmem_limit=vmem_limit)

        is_last = i == num_layers - 1
        out = aggregate(
            a_bf16, h_neigh, s_self, inv_deg,
            apply_relu=not is_last,
            out_dtype=jnp.float32 if is_last else jnp.bfloat16,
            tm=tm, tk=tk, vmem_limit=vmem_limit,
        )
        h = out  # dropout(p=0.5) -> identity in eval mode

    out = out[:num_nodes, :output_dim].astype(jnp.float32)
    return jnp.squeeze(out)  # matches x.squeeze()


# ----------------------------------------------------------------------------
# Pure-JAX f32 reference (tolerance check for the bf16 kernel path)
# ----------------------------------------------------------------------------
def gnn_reference(params, x, edge_index, edge_weight):
    n = x.shape[0]
    src, dst = edge_index[0], edge_index[1]
    adj = jnp.zeros((n, n), jnp.float32).at[dst, src].add(
        edge_weight.astype(jnp.float32))
    deg = jnp.maximum(jnp.zeros((n,), jnp.float32).at[dst].add(1.0), 1.0)
    a = adj / deg[:, None]
    h = x.astype(jnp.float32)
    for i, (wn, ws, b) in enumerate(params):
        out = a @ (h @ wn) + h @ ws + b
        if i < len(params) - 1:
            out = jax.nn.relu(out)
        h = out
    return jnp.squeeze(h)


def init_params(key, input_dim, hidden_dim, output_dim, num_layers=3):
    """Deterministic Glorot-ish init; shapes mirror GraphSAGE(in, out)."""
    dims = [input_dim] + [hidden_dim] * (num_layers - 1) + [output_dim]
    params = []
    for i in range(num_layers):
        f_in, f_out = dims[i], dims[i + 1]
        key, k1, k2 = jax.random.split(key, 3)
        scale = (2.0 / (f_in + f_out)) ** 0.5
        w_neigh = scale * jax.random.normal(k1, (f_in, f_out), jnp.float32)
        w_self = scale * jax.random.normal(k2, (f_in, f_out), jnp.float32)
        bias = jnp.zeros((f_out,), jnp.float32)
        params.append((w_neigh, w_self, bias))
    return params


if __name__ == "__main__":
    key = jax.random.PRNGKey(0)

    # Small synthetic graph: 16 nodes, 8 input features, hidden 32, output 1.
    num_nodes = 16
    input_dim = 8
    hidden_dim = 32
    output_dim = 1
    num_edges = 48

    key, kx, ksrc, kdst, kw, kp = jax.random.split(key, 6)
    x = jax.random.normal(kx, (num_nodes, input_dim), jnp.float32)
    src = jax.random.randint(ksrc, (num_edges,), 0, num_nodes, jnp.int32)
    dst = jax.random.randint(kdst, (num_edges,), 0, num_nodes, jnp.int32)
    edge_index = jnp.stack([src, dst], axis=0)            # [2, E]
    edge_weight = jax.random.uniform(kw, (num_edges,), jnp.float32)

    params = init_params(kp, input_dim, hidden_dim, output_dim, num_layers=3)

    out = gnn_forward(params, x, edge_index, edge_weight)
    out = jax.block_until_ready(out)
    assert out.shape == (num_nodes,), out.shape

    ref = jax.block_until_ready(gnn_reference(params, x, edge_index, edge_weight))
    assert np.allclose(np.asarray(out), np.asarray(ref), rtol=5e-2, atol=5e-2), (
        np.max(np.abs(np.asarray(out) - np.asarray(ref))))

    print("KERNEL_OK")
</pallas_src>

<mosaic_0001>
module attributes {stable_mosaic.version = 11 : i64} {
  func.func @transform_kernel(%arg0: i32, %arg1: memref<128x128xbf16, #tpu.memory_space<vmem>>, %arg2: memref<128x256xbf16, #tpu.memory_space<vmem>>, %arg3: memref<1x128xf32, #tpu.memory_space<vmem>>, %arg4: memref<128x128xbf16, #tpu.memory_space<vmem>>, %arg5: memref<128x128xf32, #tpu.memory_space<vmem>>) attributes {dimension_semantics = [#tpu.dimension_semantics<parallel>], iteration_bounds = array<i64: 1>, scalar_prefetch = 0 : i64, scratch_operands = 0 : i64, tpu.core_type = #tpu.core_type<tc>, window_params = [{transform_indices = @transform_0, window_bounds = array<i64: 128, 128>}, {pipeline_mode = #tpu.pipeline_mode<synchronous>, transform_indices = @transform_1, window_bounds = array<i64: 128, 256>}, {pipeline_mode = #tpu.pipeline_mode<synchronous>, transform_indices = @transform_2, window_bounds = array<i64: 1, 128>}, {transform_indices = @transform_3, window_bounds = array<i64: 128, 128>}, {transform_indices = @transform_4, window_bounds = array<i64: 128, 128>}]} {
    %c0 = arith.constant 0 : index
    %c0_0 = arith.constant 0 : index
    %0 = vector.load %arg1[%c0, %c0_0] : memref<128x128xbf16, #tpu.memory_space<vmem>>, vector<128x128xbf16>
    %c0_1 = arith.constant 0 : index
    %c0_2 = arith.constant 0 : index
    %1 = vector.load %arg2[%c0_1, %c0_2] : memref<128x256xbf16, #tpu.memory_space<vmem>>, vector<128x256xbf16>
    %cst = arith.constant dense<0.000000e+00> : vector<128x256xf32>
    %2 = tpu.matmul %0, %1, %cst {dimension_numbers = #tpu.dot_dimension_numbers<[1], [0], [0], [1], [0, 0, 1, 1], [], []>} : vector<128x128xbf16>, vector<128x256xbf16>, vector<128x256xf32> -> vector<128x256xf32>
    %3 = vector.extract_strided_slice %2 {offsets = [0, 0], sizes = [128, 128], strides = [1, 1]} : vector<128x256xf32> to vector<128x128xf32>
    %4 = arith.truncf %3 : vector<128x128xf32> to vector<128x128xbf16>
    %c0_3 = arith.constant 0 : index
    %c0_4 = arith.constant 0 : index
    %5 = vector.load %arg4[%c0_3, %c0_4] : memref<128x128xbf16, #tpu.memory_space<vmem>>, vector<128x128xbf16>
    tpu.vector_store %arg4[%c0_3, %c0_4], %4 {strides = array<i32>} : memref<128x128xbf16, #tpu.memory_space<vmem>>, vector<128x128xbf16>,
    %6 = vector.extract_strided_slice %2 {offsets = [0, 128], sizes = [128, 128], strides = [1, 1]} : vector<128x256xf32> to vector<128x128xf32>
    %c0_5 = arith.constant 0 : index
    %c0_6 = arith.constant 0 : index
    %7 = vector.load %arg3[%c0_5, %c0_6] : memref<1x128xf32, #tpu.memory_space<vmem>>, vector<1x128xf32>
    %8 = vector.broadcast %7 : vector<1x128xf32> to vector<128x128xf32>
    %9 = arith.addf %6, %8 : vector<128x128xf32>
    %c0_7 = arith.constant 0 : index
    %c0_8 = arith.constant 0 : index
    %10 = vector.load %arg5[%c0_7, %c0_8] : memref<128x128xf32, #tpu.memory_space<vmem>>, vector<128x128xf32>
    tpu.vector_store %arg5[%c0_7, %c0_8], %9 {strides = array<i32>} : memref<128x128xf32, #tpu.memory_space<vmem>>, vector<128x128xf32>,
    return
  }
  func.func @transform_0(%arg0: i32) -> (i32, i32) {
    %c0_i32 = arith.constant 0 : i32
    %c0_i32_0 = arith.constant 0 : i32
    return %arg0, %c0_i32 : i32, i32
  }
  func.func @transform_1(%arg0: i32) -> (i32, i32) {
    %c0_i32 = arith.constant 0 : i32
    %c0_i32_0 = arith.constant 0 : i32
    %c0_i32_1 = arith.constant 0 : i32
    return %c0_i32, %c0_i32_0 : i32, i32
  }
  func.func @transform_2(%arg0: i32) -> (i32, i32) {
    %c0_i32 = arith.constant 0 : i32
    %c0_i32_0 = arith.constant 0 : i32
    %c0_i32_1 = arith.constant 0 : i32
    return %c0_i32, %c0_i32_0 : i32, i32
  }
  func.func @transform_3(%arg0: i32) -> (i32, i32) {
    %c0_i32 = arith.constant 0 : i32
    %c0_i32_0 = arith.constant 0 : i32
    return %arg0, %c0_i32 : i32, i32
  }
  func.func @transform_4(%arg0: i32) -> (i32, i32) {
    %c0_i32 = arith.constant 0 : i32
    %c0_i32_0 = arith.constant 0 : i32
    return %arg0, %c0_i32 : i32, i32
  }
}

</mosaic_0001>

<llo_original>
// kernel: tpu_custom_call.1
$region0: #{tpu_custom_call.1}
  #allocation0 [shape = 'u32[]', space=smem, size = 0x4, offset = 0x4, fixed_abs, tag = 'smem constant byte address 0x4 - core index']
  #allocation1 [shape = 'u32[144,128]{1,0:T(1,128)}', space=vmem, size = 0x12000, scoped, tag = 'internal scratch']
  %s0 = inlined_call_operand.hbm [shape: bf16[128,128], index: 0, kind: input, shape index: {}]
  %s1 = inlined_call_operand.hbm [shape: bf16[128,256], index: 1, kind: input, shape index: {}]
  %s2 = inlined_call_operand.vmem [shape: f32[1,128], index: 2, kind: input, shape index: {}]
  %s3 = inlined_call_operand.hbm [shape: bf16[128,128], index: 3, kind: output, shape index: {0}]
  %s4 = inlined_call_operand.hbm [shape: f32[128,128], index: 4, kind: output, shape index: {1}]
  %5 = xla_tuple %s3, %s4
  %s6 = sld [smem:[#allocation0]]
  $region38: #{tpu_custom_call.1} parent=0
    _
  %s8 = ssub.s32 1, %s6
  %s9 = scalar_select 0, %s8, %s6
  $region1: #{tpu_custom_call.1} parent=0
    #allocation2 [shape = 'u8[32768]{0}', space=vmem, size = 0x8000, scoped, tag = 'input window, operand 0, single buffered']
    #allocation3 [shape = 's32[1]{0}', space=sflag, size = 0x4, scoped, tag = 'scoped memory for tpu_custom_call.1']
    #allocation4 [shape = 's32[1]{0}', space=sflag, size = 0x4, scoped, tag = 'scoped memory for tpu_custom_call.1']
    #allocation5 [shape = 'u8[65536]{0}', space=vmem, size = 0x10000, scoped, tag = 'input window, operand 1, single buffered']
    #allocation6 [shape = 's32[1]{0}', space=sflag, size = 0x4, scoped, tag = 'scoped memory for tpu_custom_call.1']
    #allocation7 [shape = 'u8[32768]{0}', space=vmem, size = 0x8000, scoped, tag = 'output window, operand 0, single buffered']
    #allocation8 [shape = 'u8[65536]{0}', space=vmem, size = 0x10000, scoped, tag = 'output window, operand 1, single buffered']
    #allocation9 [shape = 's32[1]{0}', space=sflag, size = 0x4, scoped, tag = 'scoped memory for tpu_custom_call.1']
    %10 = vsyncpa [#allocation3], 0
    %11 = vsyncpa [#allocation6], 0
    %12 = vsyncpa [#allocation4], 0
    %13 = vsyncpa [#allocation9], 0
    // Predicated region
    $region2: #{tpu_custom_call.1} parent=1 // pred_check
      _
    $region3: #{tpu_custom_call.1} parent=1 // pred_check_branch
      %15 = sbr.rel (0) target = $region5
    $region4: #{tpu_custom_call.1} parent=1 // pred_region
      %s17 = ssub.s32 1024, 1024
      %18 = vsyncadd [#allocation3], %s17
      %s19 = sshll.u32 [#allocation2], 4
      %s20 = int_to_ptr.vmem [resolvable:$true] %s19
      %25 = dma.hbm_to_vmem [thread:$0]  %s0, 1024, %s20, [#allocation3], 64, 64, 4
    $region5: #{tpu_custom_call.1} parent=1 // pred_fallthru
      _
    // Predicated region
    $region6: #{tpu_custom_call.1} parent=1 // pred_check
      _
    $region7: #{tpu_custom_call.1} parent=1 // pred_check_branch
      %27 = sbr.rel (0) target = $region9
    $region8: #{tpu_custom_call.1} parent=1 // pred_region
      %s29 = ssub.s32 2048, 2048
      %30 = vsyncadd [#allocation6], %s29
      %s31 = sshll.u32 [#allocation5], 4
      %s32 = int_to_ptr.vmem [resolvable:$true] %s31
      %37 = dma.hbm_to_vmem [thread:$0]  %s1, 2048, %s32, [#allocation6], 128, 128, 8
    $region9: #{tpu_custom_call.1} parent=1 // pred_fallthru
      _
    // Predicated region
    $region10: #{tpu_custom_call.1} parent=1 // pred_check
      _
    $region11: #{tpu_custom_call.1} parent=1 // pred_check_branch
      %39 = sbr.rel (0) target = $region13
    $region12: #{tpu_custom_call.1} parent=1 // pred_region
      _
    $region13: #{tpu_custom_call.1} parent=1 // pred_fallthru
      _
    // Predicated region
    $region14: #{tpu_custom_call.1} parent=1 // pred_check
      _
    $region15: #{tpu_custom_call.1} parent=1 // pred_check_branch
      %41 = sbr.rel (0) target = $region17
    $region16: #{tpu_custom_call.1} parent=1 // pred_region
      %42 = dma.done [#allocation3], 1024
    $region17: #{tpu_custom_call.1} parent=1 // pred_fallthru
      _
    // Predicated region
    $region18: #{tpu_custom_call.1} parent=1 // pred_check
      _
    $region19: #{tpu_custom_call.1} parent=1 // pred_check_branch
      %44 = sbr.rel (0) target = $region21
    $region20: #{tpu_custom_call.1} parent=1 // pred_region
      %45 = dma.done [#allocation6], 2048
    $region21: #{tpu_custom_call.1} parent=1 // pred_fallthru
      _
    %v47 = vld [vmem:[#allocation2] sm:$0xf]
    %v48 = vld [vmem:[#allocation2 + $0x4] sm:$0xf]
    %v49 = vld [vmem:[#allocation2 + $0x8] sm:$0xf]
    %v50 = vld [vmem:[#allocation2 + $0xc] sm:$0xf]
    %v51 = vld [vmem:[#allocation2 + $0x10] sm:$0xf]
    %v52 = vld [vmem:[#allocation2 + $0x14] sm:$0xf]
    %v53 = vld [vmem:[#allocation2 + $0x18] sm:$0xf]
    %v54 = vld [vmem:[#allocation2 + $0x1c] sm:$0xf]
    %v55 = vld [vmem:[#allocation2 + $0x20] sm:$0xf]
    %v56 = vld [vmem:[#allocation2 + $0x24] sm:$0xf]
    %v57 = vld [vmem:[#allocation2 + $0x28] sm:$0xf]
    %v58 = vld [vmem:[#allocation2 + $0x2c] sm:$0xf]
    %v59 = vld [vmem:[#allocation2 + $0x30] sm:$0xf]
    %v60 = vld [vmem:[#allocation2 + $0x34] sm:$0xf]
    %v61 = vld [vmem:[#allocation2 + $0x38] sm:$0xf]
    %v62 = vld [vmem:[#allocation2 + $0x3c] sm:$0xf]
    %v63 = vld [vmem:[#allocation5] sm:$0xff]
    %v64 = vld [vmem:[#allocation5 + $0x8] sm:$0xff]
    %v65 = vld [vmem:[#allocation5 + $0x10] sm:$0xff]
    %v66 = vld [vmem:[#allocation5 + $0x18] sm:$0xff]
    %v67 = vld [vmem:[#allocation5 + $0x20] sm:$0xff]
    %v68 = vld [vmem:[#allocation5 + $0x28] sm:$0xff]
    %v69 = vld [vmem:[#allocation5 + $0x30] sm:$0xff]
    %v70 = vld [vmem:[#allocation5 + $0x38] sm:$0xff]
    %v71 = vld [vmem:[#allocation5 + $0x40] sm:$0xff]
    %v72 = vld [vmem:[#allocation5 + $0x48] sm:$0xff]
    %v73 = vld [vmem:[#allocation5 + $0x50] sm:$0xff]
    %v74 = vld [vmem:[#allocation5 + $0x58] sm:$0xff]
    %v75 = vld [vmem:[#allocation5 + $0x60] sm:$0xff]
    %v76 = vld [vmem:[#allocation5 + $0x68] sm:$0xff]
    %v77 = vld [vmem:[#allocation5 + $0x70] sm:$0xff]
    %v78 = vld [vmem:[#allocation5 + $0x78] sm:$0xff]
    %v95 = vunpack.c.l.b16 %v47
    %v96 = vunpack.c.l.b16 %v48
    %v97 = vunpack.c.l.b16 %v49
    %v98 = vunpack.c.l.b16 %v50
    %v99 = vunpack.c.l.b16 %v51
    %v100 = vunpack.c.l.b16 %v52
    %v101 = vunpack.c.l.b16 %v53
    %v102 = vunpack.c.l.b16 %v54
    %v103 = vunpack.c.l.b16 %v55
    %v104 = vunpack.c.l.b16 %v56
    %v105 = vunpack.c.l.b16 %v57
    %v106 = vunpack.c.l.b16 %v58
    %v107 = vunpack.c.l.b16 %v59
    %v108 = vunpack.c.l.b16 %v60
    %v109 = vunpack.c.l.b16 %v61
    %v110 = vunpack.c.l.b16 %v62
    %v111 = vpack.c.b16 %v96, %v95
    %v112 = vpack.c.b16 %v98, %v97
    %v113 = vpack.c.b16 %v100, %v99
    %v114 = vpack.c.b16 %v102, %v101
    %v115 = vpack.c.b16 %v104, %v103
    %v116 = vpack.c.b16 %v106, %v105
    %v117 = vpack.c.b16 %v108, %v107
    %v118 = vpack.c.b16 %v110, %v109
    %v143 = vunpack.c.l.b16 %v63
    %v144 = vunpack.c.h.b16 %v63
    %v145 = vunpack.c.l.b16 %v64
    %v146 = vunpack.c.h.b16 %v64
    %v147 = vunpack.c.l.b16 %v65
    %v148 = vunpack.c.h.b16 %v65
    %v149 = vunpack.c.l.b16 %v66
    %v150 = vunpack.c.h.b16 %v66
    %v151 = vunpack.c.l.b16 %v67
    %v152 = vunpack.c.h.b16 %v67
    %v153 = vunpack.c.l.b16 %v68
    %v154 = vunpack.c.h.b16 %v68
    %v155 = vunpack.c.l.b16 %v69
    %v156 = vunpack.c.h.b16 %v69
    %v157 = vunpack.c.l.b16 %v70
    %v158 = vunpack.c.h.b16 %v70
    %v159 = vunpack.c.l.b16 %v71
    %v160 = vunpack.c.h.b16 %v71
    %v161 = vunpack.c.l.b16 %v72
    %v162 = vunpack.c.h.b16 %v72
    %v163 = vunpack.c.l.b16 %v73
    %v164 = vunpack.c.h.b16 %v73
    %v165 = vunpack.c.l.b16 %v74
    %v166 = vunpack.c.h.b16 %v74
    %v167 = vunpack.c.l.b16 %v75
    %v168 = vunpack.c.h.b16 %v75
    %v169 = vunpack.c.l.b16 %v76
    %v170 = vunpack.c.h.b16 %v76
    %v171 = vunpack.c.l.b16 %v77
    %v172 = vunpack.c.h.b16 %v77
    %v173 = vunpack.c.l.b16 %v78
    %v174 = vunpack.c.h.b16 %v78
    %v175 = vpack.c.b16 %v145, %v143
    %v176 = vpack.c.b16 %v146, %v144
    %v177 = vpack.c.b16 %v149, %v147
    %v178 = vpack.c.b16 %v150, %v148
    %v179 = vpack.c.b16 %v153, %v151
    %v180 = vpack.c.b16 %v154, %v152
    %v181 = vpack.c.b16 %v157, %v155
    %v182 = vpack.c.b16 %v158, %v156
    %v183 = vpack.c.b16 %v161, %v159
    %v184 = vpack.c.b16 %v162, %v160
    %v185 = vpack.c.b16 %v165, %v163
    %v186 = vpack.c.b16 %v166, %v164
    %v187 = vpack.c.b16 %v169, %v167
    %v188 = vpack.c.b16 %v170, %v168
    %v189 = vpack.c.b16 %v173, %v171
    %v190 = vpack.c.b16 %v174, %v172
    %207 = vmatprep.subr.bf16.mxu0 %v176
    %208 = vmatpush1.bf16.msra.mxu0 %v175
    %209 = vmatprep.subr.bf16.mxu0 %v178
    %210 = vmatpush1.bf16.msra.mxu0 %v177
    %211 = vmatprep.subr.bf16.mxu0 %v180
    %212 = vmatpush1.bf16.msra.mxu0 %v179
    %213 = vmatprep.subr.bf16.mxu0 %v182
    %214 = vmatpush1.bf16.msra.mxu0 %v181
    %215 = vmatprep.subr.bf16.mxu0 %v184
    %216 = vmatpush1.bf16.msra.mxu0 %v183
    %217 = vmatprep.subr.bf16.mxu0 %v186
    %218 = vmatpush1.bf16.msra.mxu0 %v185
    %219 = vmatprep.subr.bf16.mxu0 %v188
    %220 = vmatpush1.bf16.msra.mxu0 %v187
    %221 = vmatprep.subr.bf16.mxu0 %v190
    %222 = vmatpush1.bf16.msra.mxu0 %v189
    %223 = vmatprep.subr.bf16.mxu0 0
    %224 = vmatpush1.bf16.msra.mxu0 0
    %225 = vmatprep.subr.bf16.mxu0 0
    %226 = vmatpush1.bf16.msra.mxu0 0
    %227 = vmatprep.subr.bf16.mxu0 0
    %228 = vmatpush1.bf16.msra.mxu0 0
    %229 = vmatprep.subr.bf16.mxu0 0
    %230 = vmatpush1.bf16.msra.mxu0 0
    %231 = vmatprep.subr.bf16.mxu0 0
    %232 = vmatpush1.bf16.msra.mxu0 0
    %233 = vmatprep.subr.bf16.mxu0 0
    %234 = vmatpush1.bf16.msra.mxu0 0
    %235 = vmatprep.subr.bf16.mxu0 0
    %236 = vmatpush1.bf16.msra.mxu0 0
    %237 = vmatprep.subr.bf16.mxu0 0
    %238 = vmatpush1.bf16.msra.mxu0 0
    %239 = vmatprep.mubr.bf16.mxu0 0
    %240 = vmatmul.mubr.bf16.gmra.mrb[0].mxu0 %v111
    %v241 = vpop.f32.mrb[0].mxu0
    %v242 = vadd.f32 0.0, %v241
    %v243 = vpop.f32.mrb[0].mxu0
    %v244 = vadd.f32 0.0, %v243
    %v245 = vpop.f32.mrb[0].mxu0
    %v246 = vadd.f32 0.0, %v245
    %v247 = vpop.f32.mrb[0].mxu0
    %v248 = vadd.f32 0.0, %v247
    %249 = vmatprep.mubr.bf16.mxu0 0
    %250 = vmatmul.mubr.bf16.gmra.mrb[0].mxu0 %v112
    %v251 = vpop.f32.mrb[0].mxu0
    %v252 = vadd.f32 0.0, %v251
    %v253 = vpop.f32.mrb[0].mxu0
    %v254 = vadd.f32 0.0, %v253
    %v255 = vpop.f32.mrb[0].mxu0
    %v256 = vadd.f32 0.0, %v255
    %v257 = vpop.f32.mrb[0].mxu0
    %v258 = vadd.f32 0.0, %v257
    %259 = vmatprep.mubr.bf16.mxu0 0
    %260 = vmatmul.mubr.bf16.gmra.mrb[0].mxu0 %v113
    %v261 = vpop.f32.mrb[0].mxu0
    %v262 = vadd.f32 0.0, %v261
    %v263 = vpop.f32.mrb[0].mxu0
    %v264 = vadd.f32 0.0, %v263
    %v265 = vpop.f32.mrb[0].mxu0
    %v266 = vadd.f32 0.0, %v265
    %v267 = vpop.f32.mrb[0].mxu0
    %v268 = vadd.f32 0.0, %v267
    %269 = vmatprep.mubr.bf16.mxu0 0
    %270 = vmatmul.mubr.bf16.gmra.mrb[0].mxu0 %v114
    %v271 = vpop.f32.mrb[0].mxu0
    %v272 = vadd.f32 0.0, %v271
    %v273 = vpop.f32.mrb[0].mxu0
    %v274 = vadd.f32 0.0, %v273
    %v275 = vpop.f32.mrb[0].mxu0
    %v276 = vadd.f32 0.0, %v275
    %v277 = vpop.f32.mrb[0].mxu0
    %v278 = vadd.f32 0.0, %v277
    %279 = vmatprep.mubr.bf16.mxu0 0
    %280 = vmatmul.mubr.bf16.gmra.mrb[0].mxu0 %v115
    %v281 = vpop.f32.mrb[0].mxu0
    %v282 = vadd.f32 0.0, %v281
    %v283 = vpop.f32.mrb[0].mxu0
    %v284 = vadd.f32 0.0, %v283
    %v285 = vpop.f32.mrb[0].mxu0
    %v286 = vadd.f32 0.0, %v285
    %v287 = vpop.f32.mrb[0].mxu0
    %v288 = vadd.f32 0.0, %v287
    %289 = vmatprep.mubr.bf16.mxu0 0
    %290 = vmatmul.mubr.bf16.gmra.mrb[0].mxu0 %v116
    %v291 = vpop.f32.mrb[0].mxu0
    %v292 = vadd.f32 0.0, %v291
    %v293 = vpop.f32.mrb[0].mxu0
    %v294 = vadd.f32 0.0, %v293
    %v295 = vpop.f32.mrb[0].mxu0
    %v296 = vadd.f32 0.0, %v295
    %v297 = vpop.f32.mrb[0].mxu0
    %v298 = vadd.f32 0.0, %v297
    %299 = vmatprep.mubr.bf16.mxu0 0
    %300 = vmatmul.mubr.bf16.gmra.mrb[0].mxu0 %v117
    %v301 = vpop.f32.mrb[0].mxu0
    %v302 = vadd.f32 0.0, %v301
    %v303 = vpop.f32.mrb[0].mxu0
    %v304 = vadd.f32 0.0, %v303
    %v305 = vpop.f32.mrb[0].mxu0
    %v306 = vadd.f32 0.0, %v305
    %v307 = vpop.f32.mrb[0].mxu0
    %v308 = vadd.f32 0.0, %v307
    %309 = vmatprep.mubr.bf16.mxu0 0
    %310 = vmatmul.mubr.bf16.gmra.mrb[0].mxu0 %v118
    %v311 = vpop.f32.mrb[0].mxu0
    %v312 = vadd.f32 0.0, %v311
    %v313 = vpop.f32.mrb[0].mxu0
    %v314 = vadd.f32 0.0, %v313
    %v315 = vpop.f32.mrb[0].mxu0
    %v316 = vadd.f32 0.0, %v315
    %v317 = vpop.f32.mrb[0].mxu0
    %v318 = vadd.f32 0.0, %v317
    %319 = vdwg.mxu0
    %v320 = vpack.c.bf16 %v246, %v242
    %v321 = vpack.c.bf16 %v256, %v252
    %v322 = vpack.c.bf16 %v266, %v262
    %v323 = vpack.c.bf16 %v276, %v272
    %v324 = vpack.c.bf16 %v286, %v282
    %v325 = vpack.c.bf16 %v296, %v292
    %v326 = vpack.c.bf16 %v306, %v302
    %v327 = vpack.c.bf16 %v316, %v312
    %v336 = vunpack.c.l.b16 %v320
    %v337 = vunpack.c.h.b16 %v320
    %v338 = vunpack.c.l.b16 %v321
    %v339 = vunpack.c.h.b16 %v321
    %v340 = vunpack.c.l.b16 %v322
    %v341 = vunpack.c.h.b16 %v322
    %v342 = vunpack.c.l.b16 %v323
    %v343 = vunpack.c.h.b16 %v323
    %v344 = vunpack.c.l.b16 %v324
    %v345 = vunpack.c.h.b16 %v324
    %v346 = vunpack.c.l.b16 %v325
    %v347 = vunpack.c.h.b16 %v325
    %v348 = vunpack.c.l.b16 %v326
    %v349 = vunpack.c.h.b16 %v326
    %v350 = vunpack.c.l.b16 %v327
    %v351 = vunpack.c.h.b16 %v327
    %v352 = vpack.c.b16 %v336, %v336
    %v353 = vpack.c.b16 %v337, %v337
    %v354 = vpack.c.b16 %v338, %v338
    %v355 = vpack.c.b16 %v339, %v339
    %v356 = vpack.c.b16 %v340, %v340
    %v357 = vpack.c.b16 %v341, %v341
    %v358 = vpack.c.b16 %v342, %v342
    %v359 = vpack.c.b16 %v343, %v343
    %v360 = vpack.c.b16 %v344, %v344
    %v361 = vpack.c.b16 %v345, %v345
    %v362 = vpack.c.b16 %v346, %v346
    %v363 = vpack.c.b16 %v347, %v347
    %v364 = vpack.c.b16 %v348, %v348
    %v365 = vpack.c.b16 %v349, %v349
    %v366 = vpack.c.b16 %v350, %v350
    %v367 = vpack.c.b16 %v351, %v351
    %384 = vst [vmem:[#allocation7] sm:$0xf] %v352
    %385 = vst [vmem:[#allocation7 + $0x4] sm:$0xf] %v353
    %386 = vst [vmem:[#allocation7 + $0x8] sm:$0xf] %v354
    %387 = vst [vmem:[#allocation7 + $0xc] sm:$0xf] %v355
    %388 = vst [vmem:[#allocation7 + $0x10] sm:$0xf] %v356
    %389 = vst [vmem:[#allocation7 + $0x14] sm:$0xf] %v357
    %390 = vst [vmem:[#allocation7 + $0x18] sm:$0xf] %v358
    %391 = vst [vmem:[#allocation7 + $0x1c] sm:$0xf] %v359
    %392 = vst [vmem:[#allocation7 + $0x20] sm:$0xf] %v360
    %393 = vst [vmem:[#allocation7 + $0x24] sm:$0xf] %v361
    %394 = vst [vmem:[#allocation7 + $0x28] sm:$0xf] %v362
    %395 = vst [vmem:[#allocation7 + $0x2c] sm:$0xf] %v363
    %396 = vst [vmem:[#allocation7 + $0x30] sm:$0xf] %v364
    %397 = vst [vmem:[#allocation7 + $0x34] sm:$0xf] %v365
    %398 = vst [vmem:[#allocation7 + $0x38] sm:$0xf] %v366
    %399 = vst [vmem:[#allocation7 + $0x3c] sm:$0xf] %v367
    %v400 = vld [vmem:[%s2] sm:$0x1]
    %v402 = vlaneseq
    %v403 = vshrl.u32 %v402, 7
    %v404 = vsub.s32 0, %v403
    %v405 = vrot.slane %v400, %v404
    %v407 = vadd.f32 %v244, %v405
    %v408 = vadd.f32 %v248, %v405
    %v409 = vadd.f32 %v254, %v405
    %v410 = vadd.f32 %v258, %v405
    %v411 = vadd.f32 %v264, %v405
    %v412 = vadd.f32 %v268, %v405
    %v413 = vadd.f32 %v274, %v405
    %v414 = vadd.f32 %v278, %v405
    %v415 = vadd.f32 %v284, %v405
    %v416 = vadd.f32 %v288, %v405
    %v417 = vadd.f32 %v294, %v405
    %v418 = vadd.f32 %v298, %v405
    %v419 = vadd.f32 %v304, %v405
    %v420 = vadd.f32 %v308, %v405
    %v421 = vadd.f32 %v314, %v405
    %v422 = vadd.f32 %v318, %v405
    %423 = vst [vmem:[#allocation8] sm:$0xff] %v407
    %424 = vst [vmem:[#allocation8 + $0x8] sm:$0xff] %v408
    %425 = vst [vmem:[#allocation8 + $0x10] sm:$0xff] %v409
    %426 = vst [vmem:[#allocation8 + $0x18] sm:$0xff] %v410
    %427 = vst [vmem:[#allocation8 + $0x20] sm:$0xff] %v411
    %428 = vst [vmem:[#allocation8 + $0x28] sm:$0xff] %v412
    %429 = vst [vmem:[#allocation8 + $0x30] sm:$0xff] %v413
    %430 = vst [vmem:[#allocation8 + $0x38] sm:$0xff] %v414
    %431 = vst [vmem:[#allocation8 + $0x40] sm:$0xff] %v415
    %432 = vst [vmem:[#allocation8 + $0x48] sm:$0xff] %v416
    %433 = vst [vmem:[#allocation8 + $0x50] sm:$0xff] %v417
    %434 = vst [vmem:[#allocation8 + $0x58] sm:$0xff] %v418
    %435 = vst [vmem:[#allocation8 + $0x60] sm:$0xff] %v419
    %436 = vst [vmem:[#allocation8 + $0x68] sm:$0xff] %v420
    %437 = vst [vmem:[#allocation8 + $0x70] sm:$0xff] %v421
    %438 = vst [vmem:[#allocation8 + $0x78] sm:$0xff] %v422
    // Predicated region
    $region22: #{tpu_custom_call.1} parent=1 // pred_check
      _
    $region23: #{tpu_custom_call.1} parent=1 // pred_check_branch
      %440 = sbr.rel (0) target = $region25
    $region24: #{tpu_custom_call.1} parent=1 // pred_region
      %s442 = ssub.s32 1024, 1024
      %443 = vsyncadd [#allocation4], %s442
      %s444 = sshll.u32 [#allocation7], 4
      %s445 = int_to_ptr.vmem [resolvable:$true] %s444
      %450 = dma.vmem_to_hbm [thread:$0]  %s445, 1024, %s3, [#allocation4], 64, 64, 4
    $region25: #{tpu_custom_call.1} parent=1 // pred_fallthru
      _
    // Predicated region
    $region26: #{tpu_custom_call.1} parent=1 // pred_check
      _
    $region27: #{tpu_custom_call.1} parent=1 // pred_check_branch
      %452 = sbr.rel (0) target = $region29
    $region28: #{tpu_custom_call.1} parent=1 // pred_region
      %s454 = ssub.s32 2048, 2048
      %455 = vsyncadd [#allocation9], %s454
      %s456 = sshll.u32 [#allocation8], 4
      %s457 = int_to_ptr.vmem [resolvable:$true] %s456
      %462 = dma.vmem_to_hbm [thread:$0]  %s457, 2048, %s4, [#allocation9], 128, 128, 8
    $region29: #{tpu_custom_call.1} parent=1 // pred_fallthru
      _
    // Predicated region
    $region30: #{tpu_custom_call.1} parent=1 // pred_check
      _
    $region31: #{tpu_custom_call.1} parent=1 // pred_check_branch
      %464 = sbr.rel (0) target = $region33
    $region32: #{tpu_custom_call.1} parent=1 // pred_region
      %465 = dma.done [#allocation4], 1024
    $region33: #{tpu_custom_call.1} parent=1 // pred_fallthru
      _
    // Predicated region
    $region34: #{tpu_custom_call.1} parent=1 // pred_check
      _
    $region35: #{tpu_custom_call.1} parent=1 // pred_check_branch
      %467 = sbr.rel (0) target = $region37
    $region36: #{tpu_custom_call.1} parent=1 // pred_region
      %468 = dma.done [#allocation9], 2048
    $region37: #{tpu_custom_call.1} parent=1 // pred_fallthru
      _
    %469 = vsyncpa [#allocation3], 1
    %470 = vsyncpa [#allocation6], 1
    %471 = vsyncpa [#allocation4], 1
    %472 = vsyncpa [#allocation9], 1

</llo_original>
